<compile_context>
chip_gen: v7x
topology: tpu7x:2x2x1
jax: 0.10.0
libtpu: 0.0.40
codegen_flags: <defaults>
</compile_context>

<pallas_src>
import functools

import jax
import jax.numpy as jnp
from jax.experimental import pallas as pl
from jax.experimental.pallas import tpu as pltpu


def _round_up(n, m):
    return ((n + m - 1) // m) * m


def _round_down(n, m):
    return (n // m) * m


def _temp_mem_kernel(x_ref, w_ref, b_ref, o_ref, *, seq_len, chunk, n_chunks):
    """Batched CNN encoder tile: per-tap matmuls -> running max over seq -> +b -> tanh.

    x_ref: (TB, L_blk, D)       bf16, 'same'-padded sequence (pad zero rows at
                                the start, >= pad zero rows at the end)
    w_ref: (window, D, F_pad)   bf16 conv filters, one (D, F_pad) slab per tap
    b_ref: (1, F_pad)           f32 conv bias (zero-padded lanes)
    o_ref: (TB, F_pad)          f32 pooled sentence encodings (lane-dense store)
    """
    tb = x_ref.shape[0]
    window, d, f = w_ref.shape
    neg = jnp.finfo(jnp.float32).min

    pooled = None
    for c in range(n_chunks):            # static, unrolled: few seq chunks per tile
        c0 = c * chunk
        acc = None
        for t in range(window):          # static, unrolled: one matmul per tap
            # Output position j (tap offset t - pad) reads padded-block row
            # pad + j + (t - pad) = j + t, so the tap slice starts at c0 + t.
            s = c0 + t
            xs = x_ref[:, s:s + chunk, :]                     # (TB, chunk, D) bf16
            lhs = xs.reshape(tb * chunk, d)                   # chunk % 16 == 0 -> free merge
            contrib = jnp.dot(lhs, w_ref[t],
                              preferred_element_type=jnp.float32)
            acc = contrib if acc is None else acc + contrib
        conv = acc.reshape(tb, chunk, f)                      # (TB, chunk, F_pad) f32
        if c0 + chunk > seq_len:
            # Last (partial) chunk only: exclude padded output positions from
            # the max (they can pick up real trailing rows through the taps).
            ridx = c0 + jax.lax.broadcasted_iota(jnp.int32, (1, chunk, 1), 1)
            conv = jnp.where(ridx < seq_len, conv, neg)
        cmax = jnp.max(conv, axis=1)                          # (TB, F_pad)
        pooled = cmax if pooled is None else jnp.maximum(pooled, cmax)

    # Bias after the pool (exact: bias is constant over the sequence); tanh on
    # the small pooled slab only (EUP).
    o_ref[...] = jnp.tanh(pooled + b_ref[...]).astype(o_ref.dtype)


def temp_mem_forward(x, conv_w, conv_b, *, batch_tile=256, seq_chunk=None):
    """x: (B, L, D) float32 embeddings; conv_w: (WINDOW, D, F); conv_b: (F,)."""
    B, L, D = x.shape
    window, _, F = conv_w.shape
    assert window % 2 == 1, "same-padding alignment assumes an odd conv window"
    # TODO(synk): even windows would need PyTorch Conv1d's asymmetric padding.
    pad = window // 2

    F_pad = _round_up(F, 128)            # lane-dense output stores, never below 128

    # Seq chunk: multiple of 16 so the bf16 (TB, chunk, D) -> (TB*chunk, D)
    # reshape merge stays layout-free; the running max caps the f32 conv
    # intermediate at one chunk instead of the full (TB, L, F_pad) buffer.
    if seq_chunk is None:
        seq_chunk = 32 if L > 32 else L
    chunk = _round_up(max(seq_chunk, 1), 16)
    L_out = _round_up(L, chunk)
    n_chunks = L_out // chunk
    # 'same' padding baked into the block: `pad` zero rows up front, the rest
    # (>= pad) at the end; every tap slice is then statically in range.
    L_blk = _round_up(L_out + 2 * pad, 8)

    # --- batch tile derived from VMEM capacity (v7x: 64 MiB, v5e/v6e: 128 MiB,
    #     scoped defaults much lower) instead of a hard-coded "safe" 256 ------
    try:
        vmem_cap = int(pltpu.get_tpu_info().vmem_capacity_bytes)
    except Exception:                    # conservative fallback (v7x per-TC)
        vmem_cap = 64 * 1024 * 1024
    budget = min(vmem_cap // 2, 28 * 1024 * 1024)
    per_ex = (2 * L_blk * D * 2          # double-buffered bf16 x block
              + chunk * F_pad * 4        # one f32 conv chunk
              + 2 * chunk * D * 2        # tap operand staging
              + 2 * F_pad * 4)           # double-buffered f32 output row
    b8 = _round_up(B, 8)
    tb = min(_round_up(batch_tile, 8),
             max(8, _round_down(budget // per_ex, 8)),
             b8)
    # v7x has 2 TensorCores: keep >= 2 grid steps on the 'parallel' batch axis
    # whenever the batch is large enough, so both cores get work.
    if b8 >= 16 and b8 // tb < 2:
        tb = max(8, _round_down(b8 // 2, 8))
    B_pad = _round_up(B, tb)

    # Batch/seq padding is zero-valued: padded batch rows end up as finite
    # tanh(bias) garbage that is sliced off below (keep the padding zeros).
    x_blk = jnp.pad(
        x, ((0, B_pad - B), (pad, L_blk - L - pad), (0, 0))
    ).astype(jnp.bfloat16)

    w_b = conv_w.astype(jnp.bfloat16)                       # (window, D, F)
    if F_pad != F:
        w_b = jnp.pad(w_b, ((0, 0), (0, 0), (0, F_pad - F)))
        b2 = jnp.pad(conv_b, (0, F_pad - F)).reshape(1, F_pad).astype(jnp.float32)
    else:
        b2 = conv_b.reshape(1, F_pad).astype(jnp.float32)

    vmem_limit = int(min(vmem_cap * 3 // 4,
                         max(16 * 1024 * 1024,
                             per_ex * tb + 2 * window * D * F_pad * 2 + (2 << 20))))

    kernel = functools.partial(_temp_mem_kernel,
                               seq_len=L, chunk=chunk, n_chunks=n_chunks)

    out = pl.pallas_call(
        kernel,
        out_shape=jax.ShapeDtypeStruct((B_pad, F_pad), jnp.float32),
        grid=(B_pad // tb,),
        in_specs=[
            # one batch tile per grid step; full L_blk and D (legal: full dims)
            pl.BlockSpec((tb, L_blk, D), lambda i: (i, 0, 0)),
            # weights / bias resident across the grid
            pl.BlockSpec((window, D, F_pad), lambda i: (0, 0, 0)),
            pl.BlockSpec((1, F_pad), lambda i: (0, 0)),
        ],
        out_specs=pl.BlockSpec((tb, F_pad), lambda i: (i, 0)),
        compiler_params=pltpu.CompilerParams(
            dimension_semantics=("parallel",),
            vmem_limit_bytes=vmem_limit),
    )(x_blk, w_b, b2)
    return out[:B, :F]


def temp_mem_reference(x, conv_w, conv_b):
    """Pure-JAX f32 reference of the same conv -> max-pool -> tanh encoder."""
    B, L, D = x.shape
    window, _, F = conv_w.shape
    pad = window // 2
    x_pad = jnp.pad(x, ((0, 0), (pad, pad), (0, 0)))
    acc = jnp.zeros((B, L, F), jnp.float32)
    for w in range(window):
        acc = acc + jnp.einsum("bld,df->blf", x_pad[:, w:w + L, :], conv_w[w])
    acc = acc + conv_b[None, None, :]
    return jnp.tanh(jnp.max(acc, axis=1))


if __name__ == "__main__":
    # Small, forward-consistent shapes: batch=2, seq=16, embed=32, filters=64.
    B, L, D, F, WINDOW = 2, 16, 32, 64, 3

    key = jax.random.PRNGKey(0)
    k_x, k_w, k_b, k_r = jax.random.split(key, 4)

    x = jax.random.normal(k_x, (B, L, D), dtype=jnp.float32)
    conv_w = jax.random.normal(k_w, (WINDOW, D, F), dtype=jnp.float32) * 0.1
    conv_b = jax.random.normal(k_b, (F,), dtype=jnp.float32) * 0.01
    # r_embed parameter of TEMP_MEM (only used by _create_queries, not forward)
    r_embed = jax.random.normal(k_r, (F,), dtype=jnp.float32)
    # _create_queries equivalent (plain JAX glue, not in the hot path):
    queries = jnp.stack([r_embed] * B)  # (B, F)

    out = temp_mem_forward(x, conv_w, conv_b)
    out = jax.block_until_ready(out)

    ref = temp_mem_reference(x, conv_w, conv_b)
    assert out.shape == (B, F)
    # bf16 inputs/weights (f32 accumulation) -> loosened tolerance vs f32 ref.
    assert jnp.allclose(out, ref, atol=2e-2, rtol=2e-2), "mismatch vs reference"
    # TODO(synk): original TEMP_MEM.forward discards conv_out and returns None;
    # we return the encoder output so the kernel result is observable.
    print("KERNEL_OK")
</pallas_src>

<mosaic_0001>
module attributes {stable_mosaic.version = 11 : i64} {
  func.func @_temp_mem_kernel(%arg0: i32, %arg1: memref<8x24x32xbf16, #tpu.memory_space<vmem>>, %arg2: memref<3x32x128xbf16, #tpu.memory_space<vmem>>, %arg3: memref<1x128xf32, #tpu.memory_space<vmem>>, %arg4: memref<8x128xf32, #tpu.memory_space<vmem>>) attributes {dimension_semantics = [#tpu.dimension_semantics<parallel>], iteration_bounds = array<i64: 1>, scalar_prefetch = 0 : i64, scratch_operands = 0 : i64, tpu.core_type = #tpu.core_type<tc>, window_params = [{transform_indices = @transform_0, window_bounds = array<i64: 8, 24, 32>}, {pipeline_mode = #tpu.pipeline_mode<synchronous>, transform_indices = @transform_1, window_bounds = array<i64: 3, 32, 128>}, {pipeline_mode = #tpu.pipeline_mode<synchronous>, transform_indices = @transform_2, window_bounds = array<i64: 1, 128>}, {transform_indices = @transform_3, window_bounds = array<i64: 8, 128>}]} {
    %c0 = arith.constant 0 : index
    %c0_0 = arith.constant 0 : index
    %c0_1 = arith.constant 0 : index
    %0 = vector.load %arg1[%c0, %c0_0, %c0_1] : memref<8x24x32xbf16, #tpu.memory_space<vmem>>, vector<8x16x32xbf16>
    %1 = vector.shape_cast %0 : vector<8x16x32xbf16> to vector<128x32xbf16>
    %c0_2 = arith.constant 0 : index
    %c0_3 = arith.constant 0 : index
    %c0_4 = arith.constant 0 : index
    %2 = vector.load %arg2[%c0_2, %c0_3, %c0_4] : memref<3x32x128xbf16, #tpu.memory_space<vmem>>, vector<1x32x128xbf16>
    %3 = vector.shape_cast %2 : vector<1x32x128xbf16> to vector<32x128xbf16>
    %cst = arith.constant dense<0.000000e+00> : vector<128x128xf32>
    %4 = tpu.matmul %1, %3, %cst {dimension_numbers = #tpu.dot_dimension_numbers<[1], [0], [0], [1], [0, 0, 1, 1], [], []>} : vector<128x32xbf16>, vector<32x128xbf16>, vector<128x128xf32> -> vector<128x128xf32>
    %c0_5 = arith.constant 0 : index
    %c1 = arith.constant 1 : index
    %c0_6 = arith.constant 0 : index
    %5 = vector.load %arg1[%c0_5, %c1, %c0_6] : memref<8x24x32xbf16, #tpu.memory_space<vmem>>, vector<8x16x32xbf16>
    %6 = vector.shape_cast %5 : vector<8x16x32xbf16> to vector<128x32xbf16>
    %c1_7 = arith.constant 1 : index
    %c0_8 = arith.constant 0 : index
    %c0_9 = arith.constant 0 : index
    %7 = vector.load %arg2[%c1_7, %c0_8, %c0_9] : memref<3x32x128xbf16, #tpu.memory_space<vmem>>, vector<1x32x128xbf16>
    %8 = vector.shape_cast %7 : vector<1x32x128xbf16> to vector<32x128xbf16>
    %cst_10 = arith.constant dense<0.000000e+00> : vector<128x128xf32>
    %9 = tpu.matmul %6, %8, %cst_10 {dimension_numbers = #tpu.dot_dimension_numbers<[1], [0], [0], [1], [0, 0, 1, 1], [], []>} : vector<128x32xbf16>, vector<32x128xbf16>, vector<128x128xf32> -> vector<128x128xf32>
    %10 = arith.addf %4, %9 : vector<128x128xf32>
    %c0_11 = arith.constant 0 : index
    %c2 = arith.constant 2 : index
    %c0_12 = arith.constant 0 : index
    %11 = vector.load %arg1[%c0_11, %c2, %c0_12] : memref<8x24x32xbf16, #tpu.memory_space<vmem>>, vector<8x16x32xbf16>
    %12 = vector.shape_cast %11 : vector<8x16x32xbf16> to vector<128x32xbf16>
    %c2_13 = arith.constant 2 : index
    %c0_14 = arith.constant 0 : index
    %c0_15 = arith.constant 0 : index
    %13 = vector.load %arg2[%c2_13, %c0_14, %c0_15] : memref<3x32x128xbf16, #tpu.memory_space<vmem>>, vector<1x32x128xbf16>
    %14 = vector.shape_cast %13 : vector<1x32x128xbf16> to vector<32x128xbf16>
    %cst_16 = arith.constant dense<0.000000e+00> : vector<128x128xf32>
    %15 = tpu.matmul %12, %14, %cst_16 {dimension_numbers = #tpu.dot_dimension_numbers<[1], [0], [0], [1], [0, 0, 1, 1], [], []>} : vector<128x32xbf16>, vector<32x128xbf16>, vector<128x128xf32> -> vector<128x128xf32>
    %16 = arith.addf %10, %15 : vector<128x128xf32>
    %17 = vector.shape_cast %16 : vector<128x128xf32> to vector<8x16x128xf32>
    %cst_17 = arith.constant dense<0xFF800000> : vector<8x128xf32>
    %18 = vector.multi_reduction <maximumf>, %17, %cst_17 [1] : vector<8x16x128xf32> to vector<8x128xf32>
    %c0_18 = arith.constant 0 : index
    %c0_19 = arith.constant 0 : index
    %19 = vector.load %arg3[%c0_18, %c0_19] : memref<1x128xf32, #tpu.memory_space<vmem>>, vector<1x128xf32>
    %20 = vector.broadcast %19 : vector<1x128xf32> to vector<8x128xf32>
    %21 = arith.addf %18, %20 : vector<8x128xf32>
    %22 = math.tanh %21 : vector<8x128xf32>
    %c0_20 = arith.constant 0 : index
    %c0_21 = arith.constant 0 : index
    %23 = vector.load %arg4[%c0_20, %c0_21] : memref<8x128xf32, #tpu.memory_space<vmem>>, vector<8x128xf32>
    tpu.vector_store %arg4[%c0_20, %c0_21], %22 {strides = array<i32>} : memref<8x128xf32, #tpu.memory_space<vmem>>, vector<8x128xf32>,
    return
  }
  func.func @transform_0(%arg0: i32) -> (i32, i32, i32) {
    %c0_i32 = arith.constant 0 : i32
    %c0_i32_0 = arith.constant 0 : i32
    %c0_i32_1 = arith.constant 0 : i32
    return %arg0, %c0_i32, %c0_i32_0 : i32, i32, i32
  }
  func.func @transform_1(%arg0: i32) -> (i32, i32, i32) {
    %c0_i32 = arith.constant 0 : i32
    %c0_i32_0 = arith.constant 0 : i32
    %c0_i32_1 = arith.constant 0 : i32
    %c0_i32_2 = arith.constant 0 : i32
    return %c0_i32, %c0_i32_0, %c0_i32_1 : i32, i32, i32
  }
  func.func @transform_2(%arg0: i32) -> (i32, i32) {
    %c0_i32 = arith.constant 0 : i32
    %c0_i32_0 = arith.constant 0 : i32
    %c0_i32_1 = arith.constant 0 : i32
    return %c0_i32, %c0_i32_0 : i32, i32
  }
  func.func @transform_3(%arg0: i32) -> (i32, i32) {
    %c0_i32 = arith.constant 0 : i32
    %c0_i32_0 = arith.constant 0 : i32
    return %arg0, %c0_i32 : i32, i32
  }
}

</mosaic_0001>

<llo_original>
// kernel: tpu_custom_call.1
$region0: #{tpu_custom_call.1}
  #allocation0 [shape = 'u32[]', space=smem, size = 0x4, offset = 0x4, fixed_abs, tag = 'smem constant byte address 0x4 - core index']
  #allocation1 [shape = 'u32[144,128]{1,0:T(1,128)}', space=vmem, size = 0x12000, scoped, tag = 'internal scratch']
  %s0 = inlined_call_operand.hbm [shape: bf16[8,24,32], index: 0, kind: input, shape index: {}]
  %s1 = inlined_call_operand.hbm [shape: bf16[3,32,128], index: 1, kind: input, shape index: {}]
  %s2 = inlined_call_operand.vmem [shape: f32[1,128], index: 2, kind: input, shape index: {}]
  %s3 = inlined_call_operand.hbm [shape: f32[8,128], index: 3, kind: output, shape index: {}]
  %s4 = sld [smem:[#allocation0]]
  $region30: #{tpu_custom_call.1} parent=0
    _
  %s6 = ssub.s32 1, %s4
  %s7 = scalar_select 0, %s6, %s4
  $region1: #{tpu_custom_call.1} parent=0
    #allocation2 [shape = 'u8[49152]{0}', space=vmem, size = 0xc000, scoped, tag = 'input window, operand 0, single buffered']
    #allocation3 [shape = 's32[1]{0}', space=sflag, size = 0x4, scoped, tag = 'scoped memory for tpu_custom_call.1']
    #allocation4 [shape = 's32[1]{0}', space=sflag, size = 0x4, scoped, tag = 'scoped memory for tpu_custom_call.1']
    #allocation5 [shape = 'u8[24576]{0}', space=vmem, size = 0x6000, scoped, tag = 'input window, operand 1, single buffered']
    #allocation6 [shape = 's32[1]{0}', space=sflag, size = 0x4, scoped, tag = 'scoped memory for tpu_custom_call.1']
    #allocation7 [shape = 'u8[4096]{0}', space=vmem, size = 0x1000, scoped, tag = 'output window, operand 0, single buffered']
    %8 = vsyncpa [#allocation3], 0
    %9 = vsyncpa [#allocation6], 0
    %10 = vsyncpa [#allocation4], 0
    // Predicated region
    $region2: #{tpu_custom_call.1} parent=1 // pred_check
      _
    $region3: #{tpu_custom_call.1} parent=1 // pred_check_branch
      %12 = sbr.rel (0) target = $region5
    $region4: #{tpu_custom_call.1} parent=1 // pred_region
      %s14 = ssub.s32 1536, 1536
      %15 = vsyncadd [#allocation3], %s14
      %s16 = sshll.u32 [#allocation2], 4
      %s17 = int_to_ptr.vmem [resolvable:$true] %s16
      %22 = dma.hbm_to_vmem [thread:$0]  %s0, 1536, %s17, [#allocation3], 64, 64, 4
    $region5: #{tpu_custom_call.1} parent=1 // pred_fallthru
      _
    // Predicated region
    $region6: #{tpu_custom_call.1} parent=1 // pred_check
      _
    $region7: #{tpu_custom_call.1} parent=1 // pred_check_branch
      %24 = sbr.rel (0) target = $region9
    $region8: #{tpu_custom_call.1} parent=1 // pred_region
      %s26 = ssub.s32 768, 768
      %27 = vsyncadd [#allocation6], %s26
      %s28 = sshll.u32 [#allocation5], 4
      %s29 = int_to_ptr.vmem [resolvable:$true] %s28
      %34 = dma.hbm_to_vmem [thread:$0]  %s1, 768, %s29, [#allocation6], 64, 64, 4
    $region9: #{tpu_custom_call.1} parent=1 // pred_fallthru
      _
    // Predicated region
    $region10: #{tpu_custom_call.1} parent=1 // pred_check
      _
    $region11: #{tpu_custom_call.1} parent=1 // pred_check_branch
      %36 = sbr.rel (0) target = $region13
    $region12: #{tpu_custom_call.1} parent=1 // pred_region
      _
    $region13: #{tpu_custom_call.1} parent=1 // pred_fallthru
      _
    // Predicated region
    $region14: #{tpu_custom_call.1} parent=1 // pred_check
      _
    $region15: #{tpu_custom_call.1} parent=1 // pred_check_branch
      %38 = sbr.rel (0) target = $region17
    $region16: #{tpu_custom_call.1} parent=1 // pred_region
      %39 = dma.done [#allocation3], 1536
    $region17: #{tpu_custom_call.1} parent=1 // pred_fallthru
      _
    // Predicated region
    $region18: #{tpu_custom_call.1} parent=1 // pred_check
      _
    $region19: #{tpu_custom_call.1} parent=1 // pred_check_branch
      %41 = sbr.rel (0) target = $region21
    $region20: #{tpu_custom_call.1} parent=1 // pred_region
      %42 = dma.done [#allocation6], 768
    $region21: #{tpu_custom_call.1} parent=1 // pred_fallthru
      _
    %v44 = vld [vmem:[#allocation2] sm:$0xf]
    %v45 = vld [vmem:[#allocation2 + $0x4] sm:$0xf]
    %v46 = vld [vmem:[#allocation2 + $0xc] sm:$0xf]
    %v47 = vld [vmem:[#allocation2 + $0x10] sm:$0xf]
    %v48 = vld [vmem:[#allocation2 + $0x18] sm:$0xf]
    %v49 = vld [vmem:[#allocation2 + $0x1c] sm:$0xf]
    %v50 = vld [vmem:[#allocation2 + $0x24] sm:$0xf]
    %v51 = vld [vmem:[#allocation2 + $0x28] sm:$0xf]
    %v52 = vld [vmem:[#allocation2 + $0x30] sm:$0xf]
    %v53 = vld [vmem:[#allocation2 + $0x34] sm:$0xf]
    %v54 = vld [vmem:[#allocation2 + $0x3c] sm:$0xf]
    %v55 = vld [vmem:[#allocation2 + $0x40] sm:$0xf]
    %v56 = vld [vmem:[#allocation2 + $0x48] sm:$0xf]
    %v57 = vld [vmem:[#allocation2 + $0x4c] sm:$0xf]
    %v58 = vld [vmem:[#allocation2 + $0x54] sm:$0xf]
    %v59 = vld [vmem:[#allocation2 + $0x58] sm:$0xf]
    %v60 = vld [vmem:[#allocation5] sm:$0xf]
    %v61 = vld [vmem:[#allocation5 + $0x4] sm:$0xf]
    %v62 = vld [vmem:[#allocation5 + $0x8] sm:$0xf]
    %v63 = vld [vmem:[#allocation5 + $0xc] sm:$0xf]
    %v64 = vld [vmem:[#allocation2 + $0x8] sm:$0x1]
    %v65 = vld [vmem:[#allocation2 + $0x14] sm:$0x1]
    %v66 = vld [vmem:[#allocation2 + $0x20] sm:$0x1]
    %v67 = vld [vmem:[#allocation2 + $0x2c] sm:$0x1]
    %v68 = vld [vmem:[#allocation2 + $0x38] sm:$0x1]
    %v69 = vld [vmem:[#allocation2 + $0x44] sm:$0x1]
    %v70 = vld [vmem:[#allocation2 + $0x50] sm:$0x1]
    %v71 = vld [vmem:[#allocation2 + $0x5c] sm:$0x1]
    %vm72 = vsmask.f32 3328
    %vm73 = vsmask.f32 7440
    %vm74 = vmor %vm72, %vm73
    %v76 = vshrl.u32 %v44, 16
    %v78 = vrot.slane %v76, 4
    %v79 = vshll.u32 %v44, 16
    %v81 = vrot.slane %v79, 5
    %v82 = vor.u32 %v78, %v81
    %v83 = vrot.slane %v82, 4
    %v85 = vshll.u32 %v45, 16
    %v87 = vrot.slane %v85, 5
    %v88 = vsel %vm74, %v83, %v87
    %v89 = vshrl.u32 %v45, 16
    %v91 = vrot.slane %v89, 4
    %v92 = vor.u32 %v91, %v87
    %v93 = vrot.slane %v92, 4
    %v95 = vshll.u32 %v64, 16
    %v97 = vrot.slane %v95, 5
    %v98 = vsel %vm74, %v93, %v97
    %v100 = vshrl.u32 %v46, 16
    %v102 = vrot.slane %v100, 4
    %v103 = vshll.u32 %v46, 16
    %v105 = vrot.slane %v103, 5
    %v106 = vor.u32 %v102, %v105
    %v107 = vrot.slane %v106, 4
    %v109 = vshll.u32 %v47, 16
    %v111 = vrot.slane %v109, 5
    %v112 = vsel %vm74, %v107, %v111
    %v113 = vshrl.u32 %v47, 16
    %v115 = vrot.slane %v113, 4
    %v116 = vor.u32 %v115, %v111
    %v117 = vrot.slane %v116, 4
    %v119 = vshll.u32 %v65, 16
    %v121 = vrot.slane %v119, 5
    %v122 = vsel %vm74, %v117, %v121
    %v124 = vshrl.u32 %v48, 16
    %v126 = vrot.slane %v124, 4
    %v127 = vshll.u32 %v48, 16
    %v129 = vrot.slane %v127, 5
    %v130 = vor.u32 %v126, %v129
    %v131 = vrot.slane %v130, 4
    %v133 = vshll.u32 %v49, 16
    %v135 = vrot.slane %v133, 5
    %v136 = vsel %vm74, %v131, %v135
    %v137 = vshrl.u32 %v49, 16
    %v139 = vrot.slane %v137, 4
    %v140 = vor.u32 %v139, %v135
    %v141 = vrot.slane %v140, 4
    %v143 = vshll.u32 %v66, 16
    %v145 = vrot.slane %v143, 5
    %v146 = vsel %vm74, %v141, %v145
    %v148 = vshrl.u32 %v50, 16
    %v150 = vrot.slane %v148, 4
    %v151 = vshll.u32 %v50, 16
    %v153 = vrot.slane %v151, 5
    %v154 = vor.u32 %v150, %v153
    %v155 = vrot.slane %v154, 4
    %v157 = vshll.u32 %v51, 16
    %v159 = vrot.slane %v157, 5
    %v160 = vsel %vm74, %v155, %v159
    %v161 = vshrl.u32 %v51, 16
    %v163 = vrot.slane %v161, 4
    %v164 = vor.u32 %v163, %v159
    %v165 = vrot.slane %v164, 4
    %v167 = vshll.u32 %v67, 16
    %v169 = vrot.slane %v167, 5
    %v170 = vsel %vm74, %v165, %v169
    %v172 = vshrl.u32 %v52, 16
    %v174 = vrot.slane %v172, 4
    %v175 = vshll.u32 %v52, 16
    %v177 = vrot.slane %v175, 5
    %v178 = vor.u32 %v174, %v177
    %v179 = vrot.slane %v178, 4
    %v181 = vshll.u32 %v53, 16
    %v183 = vrot.slane %v181, 5
    %v184 = vsel %vm74, %v179, %v183
    %v185 = vshrl.u32 %v53, 16
    %v187 = vrot.slane %v185, 4
    %v188 = vor.u32 %v187, %v183
    %v189 = vrot.slane %v188, 4
    %v191 = vshll.u32 %v68, 16
    %v193 = vrot.slane %v191, 5
    %v194 = vsel %vm74, %v189, %v193
    %v196 = vshrl.u32 %v54, 16
    %v198 = vrot.slane %v196, 4
    %v199 = vshll.u32 %v54, 16
    %v201 = vrot.slane %v199, 5
    %v202 = vor.u32 %v198, %v201
    %v203 = vrot.slane %v202, 4
    %v205 = vshll.u32 %v55, 16
    %v207 = vrot.slane %v205, 5
    %v208 = vsel %vm74, %v203, %v207
    %v209 = vshrl.u32 %v55, 16
    %v211 = vrot.slane %v209, 4
    %v212 = vor.u32 %v211, %v207
    %v213 = vrot.slane %v212, 4
    %v215 = vshll.u32 %v69, 16
    %v217 = vrot.slane %v215, 5
    %v218 = vsel %vm74, %v213, %v217
    %v220 = vshrl.u32 %v56, 16
    %v222 = vrot.slane %v220, 4
    %v223 = vshll.u32 %v56, 16
    %v225 = vrot.slane %v223, 5
    %v226 = vor.u32 %v222, %v225
    %v227 = vrot.slane %v226, 4
    %v229 = vshll.u32 %v57, 16
    %v231 = vrot.slane %v229, 5
    %v232 = vsel %vm74, %v227, %v231
    %v233 = vshrl.u32 %v57, 16
    %v235 = vrot.slane %v233, 4
    %v236 = vor.u32 %v235, %v231
    %v237 = vrot.slane %v236, 4
    %v239 = vshll.u32 %v70, 16
    %v241 = vrot.slane %v239, 5
    %v242 = vsel %vm74, %v237, %v241
    %v244 = vshrl.u32 %v58, 16
    %v246 = vrot.slane %v244, 4
    %v247 = vshll.u32 %v58, 16
    %v249 = vrot.slane %v247, 5
    %v250 = vor.u32 %v246, %v249
    %v251 = vrot.slane %v250, 4
    %v253 = vshll.u32 %v59, 16
    %v255 = vrot.slane %v253, 5
    %v256 = vsel %vm74, %v251, %v255
    %v257 = vshrl.u32 %v59, 16
    %v259 = vrot.slane %v257, 4
    %v260 = vor.u32 %v259, %v255
    %v261 = vrot.slane %v260, 4
    %v263 = vshll.u32 %v71, 16
    %v265 = vrot.slane %v263, 5
    %v266 = vsel %vm74, %v261, %v265
    %s267 = scalar_lea.vmem [#allocation5], 16
    %v268 = vld [vmem:[%s267] sm:$0xf]
    %v269 = vld [vmem:[%s267 + $0x4] sm:$0xf]
    %v270 = vld [vmem:[%s267 + $0x8] sm:$0xf]
    %v271 = vld [vmem:[%s267 + $0xc] sm:$0xf]
    %v272 = vunpack.c.l.b16 %v88
    %v273 = vunpack.c.l.b16 %v98
    %v274 = vunpack.c.l.b16 %v112
    %v275 = vunpack.c.l.b16 %v122
    %v276 = vunpack.c.l.b16 %v136
    %v277 = vunpack.c.l.b16 %v146
    %v278 = vunpack.c.l.b16 %v160
    %v279 = vunpack.c.l.b16 %v170
    %v280 = vunpack.c.l.b16 %v184
    %v281 = vunpack.c.l.b16 %v194
    %v282 = vunpack.c.l.b16 %v208
    %v283 = vunpack.c.l.b16 %v218
    %v284 = vunpack.c.l.b16 %v232
    %v285 = vunpack.c.l.b16 %v242
    %v286 = vunpack.c.l.b16 %v256
    %v287 = vunpack.c.l.b16 %v266
    %v288 = vpack.c.b16 %v273, %v272
    %v289 = vpack.c.b16 %v275, %v274
    %v290 = vpack.c.b16 %v277, %v276
    %v291 = vpack.c.b16 %v279, %v278
    %v292 = vpack.c.b16 %v281, %v280
    %v293 = vpack.c.b16 %v283, %v282
    %v294 = vpack.c.b16 %v285, %v284
    %v295 = vpack.c.b16 %v287, %v286
    %v300 = vunpack.c.l.b16 %v268
    %v301 = vunpack.c.l.b16 %v269
    %v302 = vunpack.c.l.b16 %v270
    %v303 = vunpack.c.l.b16 %v271
    %v304 = vpack.c.b16 %v301, %v300
    %v305 = vpack.c.b16 %v303, %v302
    %vm308 = vcmask 261120
    %v310 = vsel %vm308, %v288, 0
    %v313 = vsel %vm308, %v289, 0
    %v316 = vsel %vm308, %v290, 0
    %v319 = vsel %vm308, %v291, 0
    %v322 = vsel %vm308, %v292, 0
    %v325 = vsel %vm308, %v293, 0
    %v328 = vsel %vm308, %v294, 0
    %v331 = vsel %vm308, %v295, 0
    %333 = vmatprep.subr.bf16.mxu0 0
    %334 = vmatpush1.bf16.msra.mxu0 %v304
    %335 = vmatprep.subr.bf16.mxu0 0
    %336 = vmatpush1.bf16.msra.mxu0 %v305
    %337 = vmatprep.subr.bf16.mxu0 0
    %338 = vmatpush1.bf16.msra.mxu0 0
    %339 = vmatprep.subr.bf16.mxu0 0
    %340 = vmatpush1.bf16.msra.mxu0 0
    %341 = vmatprep.subr.bf16.mxu0 0
    %342 = vmatpush1.bf16.msra.mxu0 0
    %343 = vmatprep.subr.bf16.mxu0 0
    %344 = vmatpush1.bf16.msra.mxu0 0
    %345 = vmatprep.subr.bf16.mxu0 0
    %346 = vmatpush1.bf16.msra.mxu0 0
    %347 = vmatprep.subr.bf16.mxu0 0
    %348 = vmatpush1.bf16.msra.mxu0 0
    %349 = vmatprep.subr.bf16.mxu0 0
    %350 = vmatpush1.bf16.msra.mxu0 0
    %351 = vmatprep.subr.bf16.mxu0 0
    %352 = vmatpush1.bf16.msra.mxu0 0
    %353 = vmatprep.subr.bf16.mxu0 0
    %354 = vmatpush1.bf16.msra.mxu0 0
    %355 = vmatprep.subr.bf16.mxu0 0
    %356 = vmatpush1.bf16.msra.mxu0 0
    %357 = vmatprep.subr.bf16.mxu0 0
    %358 = vmatpush1.bf16.msra.mxu0 0
    %359 = vmatprep.subr.bf16.mxu0 0
    %360 = vmatpush1.bf16.msra.mxu0 0
    %361 = vmatprep.subr.bf16.mxu0 0
    %362 = vmatpush1.bf16.msra.mxu0 0
    %363 = vmatprep.subr.bf16.mxu0 0
    %364 = vmatpush1.bf16.msra.mxu0 0
    %365 = vmatprep.mubr.bf16.mxu0 0
    %366 = vmatmul.mubr.bf16.gmra.mrb[0].mxu0 %v310
    %v367 = vpop.f32.mrb[0].mxu0
    %v368 = vadd.f32 0.0, %v367
    %v369 = vpop.f32.mrb[0].mxu0
    %v370 = vpop.f32.mrb[0].mxu0
    %v371 = vadd.f32 0.0, %v370
    %v372 = vpop.f32.mrb[0].mxu0
    %373 = vmatprep.mubr.bf16.mxu0 0
    %374 = vmatmul.mubr.bf16.gmra.mrb[0].mxu0 %v313
    %v375 = vpop.f32.mrb[0].mxu0
    %v376 = vadd.f32 0.0, %v375
    %v377 = vpop.f32.mrb[0].mxu0
    %v378 = vpop.f32.mrb[0].mxu0
    %v379 = vadd.f32 0.0, %v378
    %v380 = vpop.f32.mrb[0].mxu0
    %381 = vmatprep.mubr.bf16.mxu0 0
    %382 = vmatmul.mubr.bf16.gmra.mrb[0].mxu0 %v316
    %v383 = vpop.f32.mrb[0].mxu0
    %v384 = vadd.f32 0.0, %v383
    %v385 = vpop.f32.mrb[0].mxu0
    %v386 = vpop.f32.mrb[0].mxu0
    %v387 = vadd.f32 0.0, %v386
    %v388 = vpop.f32.mrb[0].mxu0
    %389 = vmatprep.mubr.bf16.mxu0 0
    %390 = vmatmul.mubr.bf16.gmra.mrb[0].mxu0 %v319
    %v391 = vpop.f32.mrb[0].mxu0
    %v392 = vadd.f32 0.0, %v391
    %v393 = vpop.f32.mrb[0].mxu0
    %v394 = vpop.f32.mrb[0].mxu0
    %v395 = vadd.f32 0.0, %v394
    %v396 = vpop.f32.mrb[0].mxu0
    %397 = vmatprep.mubr.bf16.mxu0 0
    %398 = vmatmul.mubr.bf16.gmra.mrb[0].mxu0 %v322
    %v399 = vpop.f32.mrb[0].mxu0
    %v400 = vadd.f32 0.0, %v399
    %v401 = vpop.f32.mrb[0].mxu0
    %v402 = vpop.f32.mrb[0].mxu0
    %v403 = vadd.f32 0.0, %v402
    %v404 = vpop.f32.mrb[0].mxu0
    %405 = vmatprep.mubr.bf16.mxu0 0
    %406 = vmatmul.mubr.bf16.gmra.mrb[0].mxu0 %v325
    %v407 = vpop.f32.mrb[0].mxu0
    %v408 = vadd.f32 0.0, %v407
    %v409 = vpop.f32.mrb[0].mxu0
    %v410 = vpop.f32.mrb[0].mxu0
    %v411 = vadd.f32 0.0, %v410
    %v412 = vpop.f32.mrb[0].mxu0
    %413 = vmatprep.mubr.bf16.mxu0 0
    %414 = vmatmul.mubr.bf16.gmra.mrb[0].mxu0 %v328
    %v415 = vpop.f32.mrb[0].mxu0
    %v416 = vadd.f32 0.0, %v415
    %v417 = vpop.f32.mrb[0].mxu0
    %v418 = vpop.f32.mrb[0].mxu0
    %v419 = vadd.f32 0.0, %v418
    %v420 = vpop.f32.mrb[0].mxu0
    %421 = vmatprep.mubr.bf16.mxu0 0
    %422 = vmatmul.mubr.bf16.gmra.mrb[0].mxu0 %v331
    %v423 = vpop.f32.mrb[0].mxu0
    %v424 = vadd.f32 0.0, %v423
    %v425 = vpop.f32.mrb[0].mxu0
    %v426 = vpop.f32.mrb[0].mxu0
    %v427 = vadd.f32 0.0, %v426
    %v428 = vpop.f32.mrb[0].mxu0
    %429 = vdwg.mxu0
    %v446 = vunpack.c.l.b16 %v44
    %v447 = vunpack.c.l.b16 %v45
    %v448 = vunpack.c.l.b16 %v46
    %v449 = vunpack.c.l.b16 %v47
    %v450 = vunpack.c.l.b16 %v48
    %v451 = vunpack.c.l.b16 %v49
    %v452 = vunpack.c.l.b16 %v50
    %v453 = vunpack.c.l.b16 %v51
    %v454 = vunpack.c.l.b16 %v52
    %v455 = vunpack.c.l.b16 %v53
    %v456 = vunpack.c.l.b16 %v54
    %v457 = vunpack.c.l.b16 %v55
    %v458 = vunpack.c.l.b16 %v56
    %v459 = vunpack.c.l.b16 %v57
    %v460 = vunpack.c.l.b16 %v58
    %v461 = vunpack.c.l.b16 %v59
    %v462 = vpack.c.b16 %v447, %v446
    %v463 = vpack.c.b16 %v449, %v448
    %v464 = vpack.c.b16 %v451, %v450
    %v465 = vpack.c.b16 %v453, %v452
    %v466 = vpack.c.b16 %v455, %v454
    %v467 = vpack.c.b16 %v457, %v456
    %v468 = vpack.c.b16 %v459, %v458
    %v469 = vpack.c.b16 %v461, %v460
    %v474 = vunpack.c.l.b16 %v60
    %v475 = vunpack.c.l.b16 %v61
    %v476 = vunpack.c.l.b16 %v62
    %v477 = vunpack.c.l.b16 %v63
    %v478 = vpack.c.b16 %v475, %v474
    %v479 = vpack.c.b16 %v477, %v476
    %v483 = vsel %vm308, %v462, 0
    %v486 = vsel %vm308, %v463, 0
    %v489 = vsel %vm308, %v464, 0
    %v492 = vsel %vm308, %v465, 0
    %v495 = vsel %vm308, %v466, 0
    %v498 = vsel %vm308, %v467, 0
    %v501 = vsel %vm308, %v468, 0
    %v504 = vsel %vm308, %v469, 0
    %506 = vmatprep.subr.bf16.mxu0 0
    %507 = vmatpush1.bf16.msra.mxu0 %v478
    %508 = vmatprep.subr.bf16.mxu0 0
    %509 = vmatpush1.bf16.msra.mxu0 %v479
    %510 = vmatprep.subr.bf16.mxu0 0
    %511 = vmatpush1.bf16.msra.mxu0 0
    %512 = vmatprep.subr.bf16.mxu0 0
    %513 = vmatpush1.bf16.msra.mxu0 0
    %514 = vmatprep.subr.bf16.mxu0 0
    %515 = vmatpush1.bf16.msra.mxu0 0
    %516 = vmatprep.subr.bf16.mxu0 0
    %517 = vmatpush1.bf16.msra.mxu0 0
    %518 = vmatprep.subr.bf16.mxu0 0
    %519 = vmatpush1.bf16.msra.mxu0 0
    %520 = vmatprep.subr.bf16.mxu0 0
    %521 = vmatpush1.bf16.msra.mxu0 0
    %522 = vmatprep.subr.bf16.mxu0 0
    %523 = vmatpush1.bf16.msra.mxu0 0
    %524 = vmatprep.subr.bf16.mxu0 0
    %525 = vmatpush1.bf16.msra.mxu0 0
    %526 = vmatprep.subr.bf16.mxu0 0
    %527 = vmatpush1.bf16.msra.mxu0 0
    %528 = vmatprep.subr.bf16.mxu0 0
    %529 = vmatpush1.bf16.msra.mxu0 0
    %530 = vmatprep.subr.bf16.mxu0 0
    %531 = vmatpush1.bf16.msra.mxu0 0
    %532 = vmatprep.subr.bf16.mxu0 0
    %533 = vmatpush1.bf16.msra.mxu0 0
    %534 = vmatprep.subr.bf16.mxu0 0
    %535 = vmatpush1.bf16.msra.mxu0 0
    %536 = vmatprep.subr.bf16.mxu0 0
    %537 = vmatpush1.bf16.msra.mxu0 0
    %538 = vmatprep.mubr.bf16.mxu0 0
    %539 = vmatmul.mubr.bf16.gmra.mrb[0].mxu0 %v483
    %v540 = vpop.f32.mrb[0].mxu0
    %v541 = vadd.f32 %v368, %v540
    %v542 = vpop.f32.mrb[0].mxu0
    %v543 = vpop.f32.mrb[0].mxu0
    %v544 = vadd.f32 %v371, %v543
    %v545 = vpop.f32.mrb[0].mxu0
    %546 = vmatprep.mubr.bf16.mxu0 0
    %547 = vmatmul.mubr.bf16.gmra.mrb[0].mxu0 %v486
    %v548 = vpop.f32.mrb[0].mxu0
    %v549 = vadd.f32 %v376, %v548
    %v550 = vpop.f32.mrb[0].mxu0
    %v551 = vpop.f32.mrb[0].mxu0
    %v552 = vadd.f32 %v379, %v551
    %v553 = vpop.f32.mrb[0].mxu0
    %554 = vmatprep.mubr.bf16.mxu0 0
    %555 = vmatmul.mubr.bf16.gmra.mrb[0].mxu0 %v489
    %v556 = vpop.f32.mrb[0].mxu0
    %v557 = vadd.f32 %v384, %v556
    %v558 = vpop.f32.mrb[0].mxu0
    %v559 = vpop.f32.mrb[0].mxu0
    %v560 = vadd.f32 %v387, %v559
    %v561 = vpop.f32.mrb[0].mxu0
    %562 = vmatprep.mubr.bf16.mxu0 0
    %563 = vmatmul.mubr.bf16.gmra.mrb[0].mxu0 %v492
    %v564 = vpop.f32.mrb[0].mxu0
    %v565 = vadd.f32 %v392, %v564
    %v566 = vpop.f32.mrb[0].mxu0
    %v567 = vpop.f32.mrb[0].mxu0
    %v568 = vadd.f32 %v395, %v567
    %v569 = vpop.f32.mrb[0].mxu0
    %570 = vmatprep.mubr.bf16.mxu0 0
    %571 = vmatmul.mubr.bf16.gmra.mrb[0].mxu0 %v495
    %v572 = vpop.f32.mrb[0].mxu0
    %v573 = vadd.f32 %v400, %v572
    %v574 = vpop.f32.mrb[0].mxu0
    %v575 = vpop.f32.mrb[0].mxu0
    %v576 = vadd.f32 %v403, %v575
    %v577 = vpop.f32.mrb[0].mxu0
    %578 = vmatprep.mubr.bf16.mxu0 0
    %579 = vmatmul.mubr.bf16.gmra.mrb[0].mxu0 %v498
    %v580 = vpop.f32.mrb[0].mxu0
    %v581 = vadd.f32 %v408, %v580
    %v582 = vpop.f32.mrb[0].mxu0
    %v583 = vpop.f32.mrb[0].mxu0
    %v584 = vadd.f32 %v411, %v583
    %v585 = vpop.f32.mrb[0].mxu0
    %586 = vmatprep.mubr.bf16.mxu0 0
    %587 = vmatmul.mubr.bf16.gmra.mrb[0].mxu0 %v501
    %v588 = vpop.f32.mrb[0].mxu0
    %v589 = vadd.f32 %v416, %v588
    %v590 = vpop.f32.mrb[0].mxu0
    %v591 = vpop.f32.mrb[0].mxu0
    %v592 = vadd.f32 %v419, %v591
    %v593 = vpop.f32.mrb[0].mxu0
    %594 = vmatprep.mubr.bf16.mxu0 0
    %595 = vmatmul.mubr.bf16.gmra.mrb[0].mxu0 %v504
    %v596 = vpop.f32.mrb[0].mxu0
    %v597 = vadd.f32 %v424, %v596
    %v598 = vpop.f32.mrb[0].mxu0
    %v599 = vpop.f32.mrb[0].mxu0
    %v600 = vadd.f32 %v427, %v599
    %v601 = vpop.f32.mrb[0].mxu0
    %602 = vdwg.mxu0
    %v603 = vld [vmem:[#allocation2] sm:$0xe]
    %v604 = vld [vmem:[#allocation2 + $0xc] sm:$0xe]
    %v605 = vld [vmem:[#allocation2 + $0x18] sm:$0xe]
    %v606 = vld [vmem:[#allocation2 + $0x24] sm:$0xe]
    %v607 = vld [vmem:[#allocation2 + $0x30] sm:$0xe]
    %v608 = vld [vmem:[#allocation2 + $0x3c] sm:$0xe]
    %v609 = vld [vmem:[#allocation2 + $0x48] sm:$0xe]
    %v610 = vld [vmem:[#allocation2 + $0x54] sm:$0xe]
    %vm627 = vcmask 1042432
    %vm628 = vcmask 1046532
    %vm629 = vmor %vm627, %vm628
    %v630 = vrot.slane %v603, 5
    %v631 = vrot.slane %v630, 4
    %v632 = vrot.slane %v45, 5
    %v633 = vsel %vm629, %v631, %v632
    %v634 = vrot.slane %v632, 4
    %v635 = vrot.slane %v64, 5
    %v636 = vsel %vm629, %v634, %v635
    %v637 = vrot.slane %v604, 5
    %v638 = vrot.slane %v637, 4
    %v639 = vrot.slane %v47, 5
    %v640 = vsel %vm629, %v638, %v639
    %v641 = vrot.slane %v639, 4
    %v642 = vrot.slane %v65, 5
    %v643 = vsel %vm629, %v641, %v642
    %v644 = vrot.slane %v605, 5
    %v645 = vrot.slane %v644, 4
    %v646 = vrot.slane %v49, 5
    %v647 = vsel %vm629, %v645, %v646
    %v648 = vrot.slane %v646, 4
    %v649 = vrot.slane %v66, 5
    %v650 = vsel %vm629, %v648, %v649
    %v651 = vrot.slane %v606, 5
    %v652 = vrot.slane %v651, 4
    %v653 = vrot.slane %v51, 5
    %v654 = vsel %vm629, %v652, %v653
    %v655 = vrot.slane %v653, 4
    %v656 = vrot.slane %v67, 5
    %v657 = vsel %vm629, %v655, %v656
    %v658 = vrot.slane %v607, 5
    %v659 = vrot.slane %v658, 4
    %v660 = vrot.slane %v53, 5
    %v661 = vsel %vm629, %v659, %v660
    %v662 = vrot.slane %v660, 4
    %v663 = vrot.slane %v68, 5
    %v664 = vsel %vm629, %v662, %v663
    %v665 = vrot.slane %v608, 5
    %v666 = vrot.slane %v665, 4
    %v667 = vrot.slane %v55, 5
    %v668 = vsel %vm629, %v666, %v667
    %v669 = vrot.slane %v667, 4
    %v670 = vrot.slane %v69, 5
    %v671 = vsel %vm629, %v669, %v670
    %v672 = vrot.slane %v609, 5
    %v673 = vrot.slane %v672, 4
    %v674 = vrot.slane %v57, 5
    %v675 = vsel %vm629, %v673, %v674
    %v676 = vrot.slane %v674, 4
    %v677 = vrot.slane %v70, 5
    %v678 = vsel %vm629, %v676, %v677
    %v679 = vrot.slane %v610, 5
    %v680 = vrot.slane %v679, 4
    %v681 = vrot.slane %v59, 5
    %v682 = vsel %vm629, %v680, %v681
    %v683 = vrot.slane %v681, 4
    %v684 = vrot.slane %v71, 5
    %v685 = vsel %vm629, %v683, %v684
    %s686 = scalar_lea.vmem [#allocation5], 32
    %v687 = vld [vmem:[%s686] sm:$0xf]
    %v688 = vld [vmem:[%s686 + $0x4] sm:$0xf]
    %v689 = vld [vmem:[%s686 + $0x8] sm:$0xf]
    %v690 = vld [vmem:[%s686 + $0xc] sm:$0xf]
    %v691 = vunpack.c.l.b16 %v633
    %v692 = vunpack.c.l.b16 %v636
    %v693 = vunpack.c.l.b16 %v640
    %v694 = vunpack.c.l.b16 %v643
    %v695 = vunpack.c.l.b16 %v647
    %v696 = vunpack.c.l.b16 %v650
    %v697 = vunpack.c.l.b16 %v654
    %v698 = vunpack.c.l.b16 %v657
    %v699 = vunpack.c.l.b16 %v661
    %v700 = vunpack.c.l.b16 %v664
    %v701 = vunpack.c.l.b16 %v668
    %v702 = vunpack.c.l.b16 %v671
    %v703 = vunpack.c.l.b16 %v675
    %v704 = vunpack.c.l.b16 %v678
    %v705 = vunpack.c.l.b16 %v682
    %v706 = vunpack.c.l.b16 %v685
    %v707 = vpack.c.b16 %v692, %v691
    %v708 = vpack.c.b16 %v694, %v693
    %v709 = vpack.c.b16 %v696, %v695
    %v710 = vpack.c.b16 %v698, %v697
    %v711 = vpack.c.b16 %v700, %v699
    %v712 = vpack.c.b16 %v702, %v701
    %v713 = vpack.c.b16 %v704, %v703
    %v714 = vpack.c.b16 %v706, %v705
    %v719 = vunpack.c.l.b16 %v687
    %v720 = vunpack.c.l.b16 %v688
    %v721 = vunpack.c.l.b16 %v689
    %v722 = vunpack.c.l.b16 %v690
    %v723 = vpack.c.b16 %v720, %v719
    %v724 = vpack.c.b16 %v722, %v721
    %v728 = vsel %vm308, %v707, 0
    %v731 = vsel %vm308, %v708, 0
    %v734 = vsel %vm308, %v709, 0
    %v737 = vsel %vm308, %v710, 0
    %v740 = vsel %vm308, %v711, 0
    %v743 = vsel %vm308, %v712, 0
    %v746 = vsel %vm308, %v713, 0
    %v749 = vsel %vm308, %v714, 0
    %751 = vmatprep.subr.bf16.mxu0 0
    %752 = vmatpush1.bf16.msra.mxu0 %v723
    %753 = vmatprep.subr.bf16.mxu0 0
    %754 = vmatpush1.bf16.msra.mxu0 %v724
    %755 = vmatprep.subr.bf16.mxu0 0
    %756 = vmatpush1.bf16.msra.mxu0 0
    %757 = vmatprep.subr.bf16.mxu0 0
    %758 = vmatpush1.bf16.msra.mxu0 0
    %759 = vmatprep.subr.bf16.mxu0 0
    %760 = vmatpush1.bf16.msra.mxu0 0
    %761 = vmatprep.subr.bf16.mxu0 0
    %762 = vmatpush1.bf16.msra.mxu0 0
    %763 = vmatprep.subr.bf16.mxu0 0
    %764 = vmatpush1.bf16.msra.mxu0 0
    %765 = vmatprep.subr.bf16.mxu0 0
    %766 = vmatpush1.bf16.msra.mxu0 0
    %767 = vmatprep.subr.bf16.mxu0 0
    %768 = vmatpush1.bf16.msra.mxu0 0
    %769 = vmatprep.subr.bf16.mxu0 0
    %770 = vmatpush1.bf16.msra.mxu0 0
    %771 = vmatprep.subr.bf16.mxu0 0
    %772 = vmatpush1.bf16.msra.mxu0 0
    %773 = vmatprep.subr.bf16.mxu0 0
    %774 = vmatpush1.bf16.msra.mxu0 0
    %775 = vmatprep.subr.bf16.mxu0 0
    %776 = vmatpush1.bf16.msra.mxu0 0
    %777 = vmatprep.subr.bf16.mxu0 0
    %778 = vmatpush1.bf16.msra.mxu0 0
    %779 = vmatprep.subr.bf16.mxu0 0
    %780 = vmatpush1.bf16.msra.mxu0 0
    %781 = vmatprep.subr.bf16.mxu0 0
    %782 = vmatpush1.bf16.msra.mxu0 0
    %783 = vmatprep.mubr.bf16.mxu0 0
    %784 = vmatmul.mubr.bf16.gmra.mrb[0].mxu0 %v728
    %v785 = vpop.f32.mrb[0].mxu0
    %v786 = vadd.f32 0.0, %v785
    %v787 = vpop.f32.mrb[0].mxu0
    %v788 = vpop.f32.mrb[0].mxu0
    %v789 = vadd.f32 0.0, %v788
    %v790 = vpop.f32.mrb[0].mxu0
    %791 = vmatprep.mubr.bf16.mxu0 0
    %792 = vmatmul.mubr.bf16.gmra.mrb[0].mxu0 %v731
    %v793 = vpop.f32.mrb[0].mxu0
    %v794 = vadd.f32 0.0, %v793
    %v795 = vpop.f32.mrb[0].mxu0
    %v796 = vpop.f32.mrb[0].mxu0
    %v797 = vadd.f32 0.0, %v796
    %v798 = vpop.f32.mrb[0].mxu0
    %799 = vmatprep.mubr.bf16.mxu0 0
    %800 = vmatmul.mubr.bf16.gmra.mrb[0].mxu0 %v734
    %v801 = vpop.f32.mrb[0].mxu0
    %v802 = vadd.f32 0.0, %v801
    %v803 = vpop.f32.mrb[0].mxu0
    %v804 = vpop.f32.mrb[0].mxu0
    %v805 = vadd.f32 0.0, %v804
    %v806 = vpop.f32.mrb[0].mxu0
    %807 = vmatprep.mubr.bf16.mxu0 0
    %808 = vmatmul.mubr.bf16.gmra.mrb[0].mxu0 %v737
    %v809 = vpop.f32.mrb[0].mxu0
    %v810 = vadd.f32 0.0, %v809
    %v811 = vpop.f32.mrb[0].mxu0
    %v812 = vpop.f32.mrb[0].mxu0
    %v813 = vadd.f32 0.0, %v812
    %v814 = vpop.f32.mrb[0].mxu0
    %815 = vmatprep.mubr.bf16.mxu0 0
    %816 = vmatmul.mubr.bf16.gmra.mrb[0].mxu0 %v740
    %v817 = vpop.f32.mrb[0].mxu0
    %v818 = vadd.f32 0.0, %v817
    %v819 = vpop.f32.mrb[0].mxu0
    %v820 = vpop.f32.mrb[0].mxu0
    %v821 = vadd.f32 0.0, %v820
    %v822 = vpop.f32.mrb[0].mxu0
    %823 = vmatprep.mubr.bf16.mxu0 0
    %824 = vmatmul.mubr.bf16.gmra.mrb[0].mxu0 %v743
    %v825 = vpop.f32.mrb[0].mxu0
    %v826 = vadd.f32 0.0, %v825
    %v827 = vpop.f32.mrb[0].mxu0
    %v828 = vpop.f32.mrb[0].mxu0
    %v829 = vadd.f32 0.0, %v828
    %v830 = vpop.f32.mrb[0].mxu0
    %831 = vmatprep.mubr.bf16.mxu0 0
    %832 = vmatmul.mubr.bf16.gmra.mrb[0].mxu0 %v746
    %v833 = vpop.f32.mrb[0].mxu0
    %v834 = vadd.f32 0.0, %v833
    %v835 = vpop.f32.mrb[0].mxu0
    %v836 = vpop.f32.mrb[0].mxu0
    %v837 = vadd.f32 0.0, %v836
    %v838 = vpop.f32.mrb[0].mxu0
    %839 = vmatprep.mubr.bf16.mxu0 0
    %840 = vmatmul.mubr.bf16.gmra.mrb[0].mxu0 %v749
    %v841 = vpop.f32.mrb[0].mxu0
    %v842 = vadd.f32 0.0, %v841
    %v843 = vpop.f32.mrb[0].mxu0
    %v844 = vpop.f32.mrb[0].mxu0
    %v845 = vadd.f32 0.0, %v844
    %v846 = vpop.f32.mrb[0].mxu0
    %847 = vdwg.mxu0
    %v848 = vadd.f32 %v541, %v786
    %v849 = vadd.f32 %v544, %v789
    %v850 = vadd.f32 %v549, %v794
    %v851 = vadd.f32 %v552, %v797
    %v852 = vadd.f32 %v557, %v802
    %v853 = vadd.f32 %v560, %v805
    %v854 = vadd.f32 %v565, %v810
    %v855 = vadd.f32 %v568, %v813
    %v856 = vadd.f32 %v573, %v818
    %v857 = vadd.f32 %v576, %v821
    %v858 = vadd.f32 %v581, %v826
    %v859 = vadd.f32 %v584, %v829
    %v860 = vadd.f32 %v589, %v834
    %v861 = vadd.f32 %v592, %v837
    %v862 = vadd.f32 %v597, %v842
    %v863 = vadd.f32 %v600, %v845
    %v864 = vmax.f32 %v848, %v849
    %v865 = vrot.slane %v864, 4
    %v866 = vmax.f32 %v864, %v865
    %v867 = vrot.slane %v866, 2
    %v868 = vmax.f32 %v866, %v867
    %v869 = vrot.slane %v868, 1
    %v870 = vmax.f32 %v868, %v869
    %v871 = vmax.f32 %v850, %v851
    %v872 = vrot.slane %v871, 4
    %v873 = vmax.f32 %v871, %v872
    %v874 = vrot.slane %v873, 2
    %v875 = vmax.f32 %v873, %v874
    %v876 = vrot.slane %v875, 1
    %v877 = vmax.f32 %v875, %v876
    %v878 = vmax.f32 %v852, %v853
    %v879 = vrot.slane %v878, 4
    %v880 = vmax.f32 %v878, %v879
    %v881 = vrot.slane %v880, 2
    %v882 = vmax.f32 %v880, %v881
    %v883 = vrot.slane %v882, 1
    %v884 = vmax.f32 %v882, %v883
    %v885 = vmax.f32 %v854, %v855
    %v886 = vrot.slane %v885, 4
    %v887 = vmax.f32 %v885, %v886
    %v888 = vrot.slane %v887, 2
    %v889 = vmax.f32 %v887, %v888
    %v890 = vrot.slane %v889, 1
    %v891 = vmax.f32 %v889, %v890
    %v892 = vmax.f32 %v856, %v857
    %v893 = vrot.slane %v892, 4
    %v894 = vmax.f32 %v892, %v893
    %v895 = vrot.slane %v894, 2
    %v896 = vmax.f32 %v894, %v895
    %v897 = vrot.slane %v896, 1
    %v898 = vmax.f32 %v896, %v897
    %v899 = vmax.f32 %v858, %v859
    %v900 = vrot.slane %v899, 4
    %v901 = vmax.f32 %v899, %v900
    %v902 = vrot.slane %v901, 2
    %v903 = vmax.f32 %v901, %v902
    %v904 = vrot.slane %v903, 1
    %v905 = vmax.f32 %v903, %v904
    %v906 = vmax.f32 %v860, %v861
    %v907 = vrot.slane %v906, 4
    %v908 = vmax.f32 %v906, %v907
    %v909 = vrot.slane %v908, 2
    %v910 = vmax.f32 %v908, %v909
    %v911 = vrot.slane %v910, 1
    %v912 = vmax.f32 %v910, %v911
    %v913 = vmax.f32 %v862, %v863
    %v914 = vrot.slane %v913, 4
    %v915 = vmax.f32 %v913, %v914
    %v916 = vrot.slane %v915, 2
    %v917 = vmax.f32 %v915, %v916
    %v918 = vrot.slane %v917, 1
    %v919 = vmax.f32 %v917, %v918
    %v920 = vld [vmem:[%s2] sm:$0x1]
    %v922 = vlaneseq
    %v923 = vshrl.u32 %v922, 7
    %v924 = vsub.s32 0, %v923
    %v925 = vrot.slane %v920, %v924
    %v927 = vadd.f32 %v870, %v925
    %v928 = vadd.f32 %v877, %v925
    %v929 = vadd.f32 %v884, %v925
    %v930 = vadd.f32 %v891, %v925
    %v931 = vadd.f32 %v898, %v925
    %v932 = vadd.f32 %v905, %v925
    %v933 = vadd.f32 %v912, %v925
    %v934 = vadd.f32 %v919, %v925
    %v935 = vtanh.pop %v927
    %v936 = vtanh.pop %v928
    %v937 = vtanh.pop %v929
    %v938 = vtanh.pop %v930
    %v939 = vtanh.pop %v931
    %v940 = vtanh.pop %v932
    %v941 = vtanh.pop %v933
    %v942 = vtanh.pop %v934
    %v951 = vrot.slane %v936, 7
    %vm952 = vcmask 1041409
    %v953 = vsel %vm952, %v951, %v935
    %v954 = vrot.slane %v937, 6
    %vm955 = vcmask 1042434
    %v956 = vsel %vm955, %v954, %v953
    %v957 = vrot.slane %v938, 5
    %vm958 = vcmask 1043459
    %v959 = vsel %vm958, %v957, %v956
    %v960 = vrot.slane %v939, 4
    %vm961 = vcmask 1044484
    %v962 = vsel %vm961, %v960, %v959
    %v963 = vrot.slane %v940, 3
    %vm964 = vcmask 1045509
    %v965 = vsel %vm964, %v963, %v962
    %v966 = vrot.slane %v941, 2
    %vm967 = vcmask 1046534
    %v968 = vsel %vm967, %v966, %v965
    %v969 = vrot.slane %v942, 1
    %vm970 = vcmask 1047559
    %v971 = vsel %vm970, %v969, %v968
    %973 = vst [vmem:[#allocation7] sm:$0xff] %v971
    // Predicated region
    $region22: #{tpu_custom_call.1} parent=1 // pred_check
      _
    $region23: #{tpu_custom_call.1} parent=1 // pred_check_branch
      %975 = sbr.rel (0) target = $region25
    $region24: #{tpu_custom_call.1} parent=1 // pred_region
      %s977 = ssub.s32 128, 128
      %978 = vsyncadd [#allocation4], %s977
      %s980 = sshll.u32 [#allocation7], 4
      %s981 = int_to_ptr.vmem [resolvable:$true] %s980
      %983 = dma.vmem_to_hbm [thread:$0]  %s981, 128, %s3, [#allocation4]
    $region25: #{tpu_custom_call.1} parent=1 // pred_fallthru
      _
    // Predicated region
    $region26: #{tpu_custom_call.1} parent=1 // pred_check
      _
    $region27: #{tpu_custom_call.1} parent=1 // pred_check_branch
      %985 = sbr.rel (0) target = $region29
    $region28: #{tpu_custom_call.1} parent=1 // pred_region
      %986 = dma.done [#allocation4], 128
    $region29: #{tpu_custom_call.1} parent=1 // pred_fallthru
      _
    %987 = vsyncpa [#allocation3], 1
    %988 = vsyncpa [#allocation6], 1
    %989 = vsyncpa [#allocation4], 1

</llo_original>
